<compile_context>
chip_gen: v7x
topology: tpu7x:2x2x1
jax: 0.10.0
libtpu: 0.0.40
codegen_flags: <defaults>
</compile_context>

<pallas_src>
import jax
import jax.numpy as jnp
from jax.experimental import pallas as pl
from jax.experimental.pallas import tpu as pltpu


def _round_up(x, m):
    return ((x + m - 1) // m) * m


def _vmem_capacity_bytes():
    try:
        return int(pltpu.get_tpu_info().vmem_capacity_bytes)
    except Exception:
        return 64 * 1024 * 1024  # conservative (v7x per-TensorCore)


def _make_ce_kernel(C, t_tile, T_valid, T_pad):
    needs_mask = (T_valid != T_pad)

    def kernel(logits_ref, targets_ref, out_ref):
        # logits_ref : (Bt, C, Tt) native dtype (class axis on sublanes, time on lanes)
        # targets_ref: (Bt, 1, Tt) int32
        # out_ref    : (Bt, 1, 1, 128) f32 -- per-(batch-row, time-tile) loss sum,
        #              broadcast across the 128 lanes (lane-dense store)
        logits = logits_ref[...].astype(jnp.float32)          # cast per-tile in VMEM
        targets = targets_ref[...]                            # (Bt, 1, Tt)

        # numerically-stable log-sum-exp over the class (sublane) axis
        m = jnp.max(logits, axis=1, keepdims=True)             # (Bt, 1, Tt)
        shifted = logits - m                                    # (Bt, C, Tt)
        sumexp = jnp.sum(jnp.exp(shifted), axis=1, keepdims=True)

        # select the target-class shifted logit (+m terms cancel in the loss)
        class_ids = jax.lax.broadcasted_iota(jnp.int32, (1, C, 1), 1)
        mask = class_ids == targets                             # (Bt, C, Tt)
        target_shifted = jnp.sum(jnp.where(mask, shifted, 0.0),
                                 axis=1, keepdims=True)         # (Bt, 1, Tt)

        loss = jnp.log(sumexp) - target_shifted                 # (Bt, 1, Tt)

        if needs_mask:
            # zero out padded time positions (time axis was padded in the wrapper)
            pos = pl.program_id(1) * t_tile + jax.lax.broadcasted_iota(
                jnp.int32, (1, 1, t_tile), 2)
            loss = jnp.where(pos < T_valid, loss, 0.0)

        partial = jnp.sum(loss, axis=2, keepdims=True)          # (Bt, 1, 1)
        out_ref[...] = jnp.broadcast_to(partial[..., None], out_ref.shape)

    return kernel


def myloss_forward(y_pre, y_true):
    """y_pre: (B, C, T) float (f32 or bf16), y_true: (B, T) integer.
    Returns scalar mean cross-entropy (matches CrossEntropyLoss())."""
    B, C, T = y_pre.shape
    itemsize = jnp.dtype(y_pre.dtype).itemsize

    vmem_cap = _vmem_capacity_bytes()
    # per-buffer budget: half of physical VMEM, never more than 64 MiB
    budget = min(vmem_cap // 2, 64 * 1024 * 1024)

    # Approximate VMEM bytes per lane per batch row of a tile:
    # double-buffered native-dtype logits + ~6 live f32 compute temporaries
    # + double-buffered int32 targets.
    lane_cost = C * (2 * itemsize + 6 * 4) + 2 * 4

    T_128 = _round_up(T, 128)
    max_lanes = max(128, (budget // lane_cost) // 128 * 128)

    # balance time tiles to minimize padding
    n_t = -(-T_128 // max_lanes)
    if B == 1 and n_t == 1 and T_128 >= 256:
        n_t = 2                      # keep >=2 parallel grid steps (v7x: 2 TCs)
    t_tile = _round_up(-(-T_128 // n_t), 128)
    T_pad = n_t * t_tile

    # block several batch rows per step when tiles are small (amortize per-step
    # overhead); require b_tile to divide B and stay within the VMEM budget
    b_tile = 1
    if B > 1:
        cap = min(B, 8)
        if n_t == 1:
            cap = min(cap, max(1, B // 2))   # keep >=2 grid steps when possible
        for cand in range(cap, 0, -1):
            if B % cand == 0 and cand * t_tile * lane_cost <= budget:
                b_tile = cand
                break
    n_b = B // b_tile

    # pad the time axis (padded tokens are masked to zero loss in the kernel)
    y_true_i = y_true.astype(jnp.int32).reshape(B, 1, T)   # mirrors y_true.long()
    if T_pad != T:
        y_pre = jnp.pad(y_pre, ((0, 0), (0, 0), (0, T_pad - T)))
        y_true_i = jnp.pad(y_true_i, ((0, 0), (0, 0), (0, T_pad - T)))

    est = b_tile * t_tile * lane_cost + (2 << 20)
    vmem_limit = int(min(max(est, 32 << 20), vmem_cap - (4 << 20)))

    kernel = _make_ce_kernel(C, t_tile, T, T_pad)

    cost = pl.CostEstimate(
        flops=int(5 * B * C * T_pad),
        transcendentals=int(B * C * T_pad),
        bytes_accessed=int(B * C * T_pad * itemsize
                           + B * T_pad * 4
                           + B * n_t * 128 * 4),
    )

    per_tile = pl.pallas_call(
        kernel,
        out_shape=jax.ShapeDtypeStruct((B, n_t, 1, 128), jnp.float32),
        grid_spec=pltpu.PrefetchScalarGridSpec(
            num_scalar_prefetch=0,
            grid=(n_b, n_t),
            in_specs=[
                pl.BlockSpec((b_tile, C, t_tile), lambda b, t: (b, 0, t)),
                pl.BlockSpec((b_tile, 1, t_tile), lambda b, t: (b, 0, t)),
            ],
            out_specs=pl.BlockSpec((b_tile, 1, 1, 128),
                                   lambda b, t: (b, t, 0, 0)),
        ),
        compiler_params=pltpu.CompilerParams(
            dimension_semantics=("parallel", "parallel"),
            vmem_limit_bytes=vmem_limit),
        cost_estimate=cost,
    )(y_pre, y_true_i)

    # tiny final reduction in the wrapper: sum of per-tile partial sums / (B*T)
    return jnp.sum(per_tile[:, :, 0, 0]) / (B * T)


def _reference(y_pre, y_true):
    # pure-JAX reference of CrossEntropyLoss(reduction='mean') with extra dim
    y_true = y_true.astype(jnp.int32)
    logits = jnp.transpose(y_pre, (0, 2, 1)).astype(jnp.float32)  # (B, T, C)
    logp = jax.nn.log_softmax(logits, axis=-1)
    picked = jnp.take_along_axis(logp, y_true[..., None], axis=-1)[..., 0]
    return -jnp.mean(picked)


if __name__ == "__main__":
    key = jax.random.PRNGKey(0)
    B, C, T = 2, 16, 8   # batch=2, num_classes=16, timestep=8
    k1, k2 = jax.random.split(key)
    y_pre = jax.random.normal(k1, (B, C, T), dtype=jnp.float32)
    y_true = jax.random.randint(k2, (B, T), 0, C, dtype=jnp.int32)

    loss = myloss_forward(y_pre, y_true)
    jax.block_until_ready(loss)

    ref = _reference(y_pre, y_true)
    assert jnp.allclose(loss, ref, atol=1e-5, rtol=1e-5), (loss, ref)
    print("KERNEL_OK")
</pallas_src>

<mosaic_0001>
module attributes {stable_mosaic.version = 11 : i64} {
  func.func @kernel(%arg0: i32, %arg1: i32, %arg2: memref<1x16x128xf32, #tpu.memory_space<vmem>>, %arg3: memref<1x1x128xi32, #tpu.memory_space<vmem>>, %arg4: memref<1x1x1x128xf32, #tpu.memory_space<vmem>>) attributes {dimension_semantics = [#tpu.dimension_semantics<parallel>, #tpu.dimension_semantics<parallel>], iteration_bounds = array<i64: 2, 1>, scalar_prefetch = 0 : i64, scratch_operands = 0 : i64, tpu.core_type = #tpu.core_type<tc>, window_params = [{transform_indices = @transform_0, window_bounds = array<i64: 1, 16, 128>}, {transform_indices = @transform_1, window_bounds = array<i64: 1, 1, 128>}, {transform_indices = @transform_2, window_bounds = array<i64: 1, 1, 1, 128>}]} {
    %c0 = arith.constant 0 : index
    %c0_0 = arith.constant 0 : index
    %c0_1 = arith.constant 0 : index
    %0 = vector.load %arg2[%c0, %c0_0, %c0_1] : memref<1x16x128xf32, #tpu.memory_space<vmem>>, vector<1x16x128xf32>
    %c0_2 = arith.constant 0 : index
    %c0_3 = arith.constant 0 : index
    %c0_4 = arith.constant 0 : index
    %1 = vector.load %arg3[%c0_2, %c0_3, %c0_4] : memref<1x1x128xi32, #tpu.memory_space<vmem>>, vector<1x1x128xi32>
    %cst = arith.constant dense<0xFF800000> : vector<1x128xf32>
    %2 = vector.multi_reduction <maximumf>, %0, %cst [1] : vector<1x16x128xf32> to vector<1x128xf32>
    %3 = vector.shape_cast %2 : vector<1x128xf32> to vector<1x1x128xf32>
    %4 = vector.broadcast %3 : vector<1x1x128xf32> to vector<1x16x128xf32>
    %5 = arith.subf %0, %4 : vector<1x16x128xf32>
    %6 = math.exp %5 : vector<1x16x128xf32>
    %cst_5 = arith.constant dense<0.000000e+00> : vector<1x128xf32>
    %7 = vector.multi_reduction <add>, %6, %cst_5 [1] : vector<1x16x128xf32> to vector<1x128xf32>
    %8 = vector.shape_cast %7 : vector<1x128xf32> to vector<1x1x128xf32>
    %9 = tpu.iota {dimensions = array<i32: 1>} : vector<1x16x1xi32>
    %10 = vector.broadcast %9 : vector<1x16x1xi32> to vector<1x16x128xi32>
    %11 = vector.broadcast %1 : vector<1x1x128xi32> to vector<1x16x128xi32>
    %12 = arith.cmpi eq, %10, %11 : vector<1x16x128xi32>
    %cst_6 = arith.constant 0.000000e+00 : f32
    %13 = vector.broadcast %cst_6 : f32 to vector<1x16x128xf32>
    %14 = arith.select %12, %5, %13 : vector<1x16x128xi1>, vector<1x16x128xf32>
    %cst_7 = arith.constant dense<0.000000e+00> : vector<1x128xf32>
    %15 = vector.multi_reduction <add>, %14, %cst_7 [1] : vector<1x16x128xf32> to vector<1x128xf32>
    %16 = vector.shape_cast %15 : vector<1x128xf32> to vector<1x1x128xf32>
    %17 = math.log %8 : vector<1x1x128xf32>
    %18 = arith.subf %17, %16 : vector<1x1x128xf32>
    %c128_i32 = arith.constant 128 : i32
    %19 = arith.muli %arg1, %c128_i32 : i32
    %20 = tpu.iota {dimensions = array<i32: 2>} : vector<1x1x128xi32>
    %21 = vector.broadcast %19 : i32 to vector<1x1x128xi32>
    %22 = arith.addi %21, %20 : vector<1x1x128xi32>
    %c8_i32 = arith.constant 8 : i32
    %23 = vector.broadcast %c8_i32 : i32 to vector<1x1x128xi32>
    %24 = arith.cmpi slt, %22, %23 : vector<1x1x128xi32>
    %cst_8 = arith.constant 0.000000e+00 : f32
    %25 = vector.broadcast %cst_8 : f32 to vector<1x1x128xf32>
    %26 = arith.select %24, %18, %25 : vector<1x1x128xi1>, vector<1x1x128xf32>
    %cst_9 = arith.constant dense<0.000000e+00> : vector<1x1xf32>
    %27 = vector.multi_reduction <add>, %26, %cst_9 [2] : vector<1x1x128xf32> to vector<1x1xf32>
    %28 = vector.shape_cast %27 : vector<1x1xf32> to vector<1x1x1xf32>
    %29 = vector.shape_cast %28 : vector<1x1x1xf32> to vector<1x1x1x1xf32>
    %30 = vector.shape_cast %29 : vector<1x1x1x1xf32> to vector<1x1x1x1xf32>
    %31 = vector.broadcast %30 : vector<1x1x1x1xf32> to vector<1x1x1x128xf32>
    %c0_10 = arith.constant 0 : index
    %c0_11 = arith.constant 0 : index
    %c0_12 = arith.constant 0 : index
    %c0_13 = arith.constant 0 : index
    %32 = vector.load %arg4[%c0_10, %c0_11, %c0_12, %c0_13] : memref<1x1x1x128xf32, #tpu.memory_space<vmem>>, vector<1x1x1x128xf32>
    tpu.vector_store %arg4[%c0_10, %c0_11, %c0_12, %c0_13], %31 {strides = array<i32>} : memref<1x1x1x128xf32, #tpu.memory_space<vmem>>, vector<1x1x1x128xf32>,
    return
  }
  func.func @transform_0(%arg0: i32, %arg1: i32) -> (i32, i32, i32) {
    %c0_i32 = arith.constant 0 : i32
    %c0_i32_0 = arith.constant 0 : i32
    return %arg0, %c0_i32, %arg1 : i32, i32, i32
  }
  func.func @transform_1(%arg0: i32, %arg1: i32) -> (i32, i32, i32) {
    %c0_i32 = arith.constant 0 : i32
    %c0_i32_0 = arith.constant 0 : i32
    return %arg0, %c0_i32, %arg1 : i32, i32, i32
  }
  func.func @transform_2(%arg0: i32, %arg1: i32) -> (i32, i32, i32, i32) {
    %c0_i32 = arith.constant 0 : i32
    %c0_i32_0 = arith.constant 0 : i32
    %c0_i32_1 = arith.constant 0 : i32
    return %arg0, %arg1, %c0_i32, %c0_i32_0 : i32, i32, i32, i32
  }
}

</mosaic_0001>

<llo_original>
// kernel: tpu_custom_call.1
$region0: #{tpu_custom_call.1}
  #allocation0 [shape = 'u32[]', space=smem, size = 0x4, offset = 0x4, fixed_abs, tag = 'smem constant byte address 0x4 - core index']
  #allocation1 [shape = 'u32[144,128]{1,0:T(1,128)}', space=vmem, size = 0x12000, scoped, tag = 'internal scratch']
  %s0 = inlined_call_operand.hbm [shape: f32[2,16,128], index: 0, kind: input, shape index: {}]
  %s1 = inlined_call_operand.vmem [shape: s32[2,1,128], index: 1, kind: input, shape index: {}]
  %s2 = inlined_call_operand.hbm [shape: f32[2,1,1,128], index: 2, kind: output, shape index: {}]
  %s3 = sld [smem:[#allocation0]]
  $region45: #{tpu_custom_call.1} parent=0
    _
  %s5 = ssub.s32 1, %s3
  %s6 = scalar_select 0, %s5, %s3
  $region1: #{tpu_custom_call.1} parent=0
    #allocation2 [shape = 'u8[16384]{0}', space=vmem, size = 0x4000, scoped, tag = 'input window, operand 0']
    #allocation3 [shape = 's32[2]{0}', space=sflag, size = 0x8, scoped, tag = 'scoped memory for tpu_custom_call.1']
    #allocation4 [shape = 's32[2]{0}', space=sflag, size = 0x8, scoped, tag = 'scoped memory for tpu_custom_call.1']
    #allocation5 [shape = 'u8[1024]{0}', space=vmem, size = 0x400, scoped, tag = 'output window, operand 0']
    %7 = vsyncpa [#allocation3], 0
    %s8 = scalar_lea.sflag [#allocation3], 1
    %9 = vsyncpa %s8, 0
    %10 = vsyncpa [#allocation4], 0
    %s11 = scalar_lea.sflag [#allocation4], 1
    %12 = vsyncpa %s11, 0
    loop: start=0, step=1, limit=4
    $region2: #{tpu_custom_call.1} parent=1 // loop_pre_header
      _
    $region3: #{tpu_custom_call.1} parent=1 // loop_header
      %s14 = sphi 0, %s18
      %p15 = scmp.ge.s32.totalorder %s14, 4
      %s21 = sphi 0, %s33
      %s22 = sphi 0, %s29
      %s23 = sphi 0, %s21
      %s24 = sphi 0, %s22
      %s25 = sphi 0, %s23
      %s26 = sphi 0, %s24
      %s38 = sphi 0, %s40
      %s41 = sphi 0, %s38
      %s42 = sphi 0, %s41
      %s58 = sphi 0, %s42
      %s66 = sphi 0, %s68
      %s69 = sphi 0, %s66
      %s70 = sphi 0, %s69
      %s86 = sphi 0, %s70
      %s94 = sphi 0, %s96
      %s97 = sphi 0, %s94
      %s98 = sphi 0, %s97
      %s114 = sphi 0, %s98
    $region4: #{tpu_custom_call.1} parent=1 // loop_header_branch
      %17 = sbr.rel (%p15) target = $region8
    $region5: #{tpu_custom_call.1} parent=1 // loop_body
      %s19 = ssub.s32 %s14, 1
      %s20 = ssub.s32 %s14, 2
      %s27 = sadd.s32 1, %s22
      %p28 = scmp.ge.s32.totalorder %s27, 1
      %s29 = scalar_select %p28, 0, %s27
      %s30 = sadd.s32 1, %s21
      %s31 = scalar_select %p28, %s30, %s21
      %p32 = scmp.ge.s32.totalorder %s31, 2
      %s33 = scalar_select %p32, 0, %s31
      %s34 = ssub.s32 %s21, %s33
      %s35 = ssub.s32 %s22, %s29
      %s36 = sor.u32 %s34, %s35
      %p37 = scmp.eq.s32.totalorder %s36, 0
      %s39 = sadd.s32 %s38, 1
      %s40 = scalar_select %p37, %s38, %s39
      %p43 = pneg %p37
      %p44 = scmp.eq.s32.totalorder %s14, 1
      %p45 = por %p43, %p44
      %p46 = scmp.ne.s32.totalorder %s38, %s41
      %p47 = scmp.eq.s32.totalorder %s14, 0
      %p48 = por %p46, %p47
      %p49 = scmp.ne.s32.totalorder %s38, %s41
      %p50 = scmp.eq.s32.totalorder %s19, 1
      %p51 = por %p49, %p50
      %p52 = scmp.ne.s32.totalorder %s41, %s42
      %p53 = scmp.eq.s32.totalorder %s19, 0
      %p54 = por %p52, %p53
      %p55 = scmp.ne.s32.totalorder %s41, %s42
      %p56 = scmp.eq.s32.totalorder %s20, 1
      %p57 = por %p55, %p56
      %p59 = scmp.ne.s32.totalorder %s42, %s58
      %p60 = scmp.eq.s32.totalorder %s20, 0
      %p61 = por %p59, %p60
      %s62 = ssub.s32 %s21, %s33
      %s63 = ssub.s32 %s22, %s29
      %s64 = sor.u32 %s62, %s63
      %p65 = scmp.eq.s32.totalorder %s64, 0
      %s67 = sadd.s32 %s66, 1
      %s68 = scalar_select %p65, %s66, %s67
      %p71 = pneg %p65
      %p72 = scmp.eq.s32.totalorder %s14, 1
      %p73 = por %p71, %p72
      %p74 = scmp.ne.s32.totalorder %s66, %s69
      %p75 = scmp.eq.s32.totalorder %s14, 0
      %p76 = por %p74, %p75
      %p77 = scmp.ne.s32.totalorder %s66, %s69
      %p78 = scmp.eq.s32.totalorder %s19, 1
      %p79 = por %p77, %p78
      %p80 = scmp.ne.s32.totalorder %s69, %s70
      %p81 = scmp.eq.s32.totalorder %s19, 0
      %p82 = por %p80, %p81
      %p83 = scmp.ne.s32.totalorder %s69, %s70
      %p84 = scmp.eq.s32.totalorder %s20, 1
      %p85 = por %p83, %p84
      %p87 = scmp.ne.s32.totalorder %s70, %s86
      %p88 = scmp.eq.s32.totalorder %s20, 0
      %p89 = por %p87, %p88
      %s90 = ssub.s32 %s21, %s33
      %s91 = ssub.s32 %s22, %s29
      %s92 = sor.u32 %s90, %s91
      %p93 = scmp.eq.s32.totalorder %s92, 0
      %s95 = sadd.s32 %s94, 1
      %s96 = scalar_select %p93, %s94, %s95
      %p99 = pneg %p93
      %p100 = scmp.eq.s32.totalorder %s14, 1
      %p101 = por %p99, %p100
      %p102 = scmp.ne.s32.totalorder %s94, %s97
      %p103 = scmp.eq.s32.totalorder %s14, 0
      %p104 = por %p102, %p103
      %p105 = scmp.ne.s32.totalorder %s94, %s97
      %p106 = scmp.eq.s32.totalorder %s19, 1
      %p107 = por %p105, %p106
      %p108 = scmp.ne.s32.totalorder %s97, %s98
      %p109 = scmp.eq.s32.totalorder %s19, 0
      %p110 = por %p108, %p109
      %p111 = scmp.ne.s32.totalorder %s97, %s98
      %p112 = scmp.eq.s32.totalorder %s20, 1
      %p113 = por %p111, %p112
      %p115 = scmp.ne.s32.totalorder %s98, %s114
      %p116 = scmp.eq.s32.totalorder %s20, 0
      %p117 = por %p115, %p116
      %p118 = scmp.le.s32.totalorder 1, %s14
      %p119 = scmp.lt.s32.totalorder %s14, 3
      %p120 = pnand %p118, %p119
      %p121 = pneg %p120
      // Predicated region
      $region9: #{tpu_custom_call.1} parent=5 // pred_check
        _
      $region10: #{tpu_custom_call.1} parent=5 // pred_check_branch
        %123 = sbr.rel (%p120) target = $region12
      $region11: #{tpu_custom_call.1} parent=5 // pred_region
        %s124 = ssub.s32 %s14, 1
      $region12: #{tpu_custom_call.1} parent=5 // pred_fallthru
        _
      %p125 = scmp.lt.s32.totalorder %s14, 2
      // Predicated region
      $region13: #{tpu_custom_call.1} parent=5 // pred_check
        %p126 = pneg %p125
      $region14: #{tpu_custom_call.1} parent=5 // pred_check_branch
        %128 = sbr.rel (%p126) target = $region16
      $region15: #{tpu_custom_call.1} parent=5 // pred_region
        // Predicated region
        $region17: #{tpu_custom_call.1} parent=15 // pred_check
          %p129 = pneg %p48
        $region18: #{tpu_custom_call.1} parent=15 // pred_check_branch
          %131 = sbr.rel (%p129) target = $region20
        $region19: #{tpu_custom_call.1} parent=15 // pred_region
          %s132 = sand.u32 %s38, 1
          %s133 = scalar_lea.sflag [#allocation3], %s132
          %s134 = sand.u32 %s38, 1
          %s135 = smul.addr %s134, 16
          %s136 = scalar_lea.vmem [#allocation2], %s135
          %s138 = ssub.s32 256, 256
          %139 = vsyncadd %s133, %s138
          %s140 = smul.addr %s21, 2
          %s141 = sadd.s32 %s22, %s140
          %s142 = smul.addr %s141, 128
          %s143 = scalar_lea.hbm %s0, %s142
          %s144 = sshll.u32 %s136, 4
          %s145 = int_to_ptr.vmem [resolvable:$true] %s144
          %150 = dma.hbm_to_vmem [thread:$0]  %s143, 256, %s145, %s133, 128, 128, 8
        $region20: #{tpu_custom_call.1} parent=15 // pred_fallthru
          _
        // Predicated region
        $region21: #{tpu_custom_call.1} parent=15 // pred_check
          %p151 = pneg %p76
        $region22: #{tpu_custom_call.1} parent=15 // pred_check_branch
          %153 = sbr.rel (%p151) target = $region24
        $region23: #{tpu_custom_call.1} parent=15 // pred_region
          %p154 = scmp.lt.s32.totalorder %s21, 1
          %s155 = scalar_select %p154, %s21, 1
          %p156 = scmp.lt.s32.totalorder %s22, 0
          %s157 = scalar_select %p156, %s22, 0
          %s158 = sadd.s32 %s157, %s155
          %s159 = scalar_lea.vmem %s1, %s158
        $region24: #{tpu_custom_call.1} parent=15 // pred_fallthru
          _
      $region16: #{tpu_custom_call.1} parent=5 // pred_fallthru
        _
      %p160 = scmp.le.s32.totalorder 1, %s14
      %p161 = scmp.lt.s32.totalorder %s14, 3
      %p162 = pnand %p160, %p161
      %p163 = pneg %p162
      // Predicated region
      $region25: #{tpu_custom_call.1} parent=5 // pred_check
        _
      $region26: #{tpu_custom_call.1} parent=5 // pred_check_branch
        %165 = sbr.rel (%p162) target = $region28
      $region27: #{tpu_custom_call.1} parent=5 // pred_region
        %s166 = ssub.s32 %s14, 1
        %s167 = sand.u32 %s41, 1
        %s168 = scalar_lea.sflag [#allocation3], %s167
        %s169 = sand.u32 %s41, 1
        %s170 = smul.addr %s169, 16
        %s171 = scalar_lea.vmem [#allocation2], %s170
        // Predicated region
        $region29: #{tpu_custom_call.1} parent=27 // pred_check
          %p172 = pneg %p54
        $region30: #{tpu_custom_call.1} parent=27 // pred_check_branch
          %174 = sbr.rel (%p172) target = $region32
        $region31: #{tpu_custom_call.1} parent=27 // pred_region
          %175 = dma.done %s168, 256
        $region32: #{tpu_custom_call.1} parent=27 // pred_fallthru
          _
        %s176 = sand.u32 %s41, 1
        %s177 = scalar_lea.sflag [#allocation3], %s176
        %s178 = sand.u32 %s41, 1
        %s179 = smul.addr %s178, 16
        %s180 = scalar_lea.vmem [#allocation2], %s179
        %p181 = pneg %p54
        %p182 = pneg %p51
        %p183 = scmp.lt.s32.totalorder %s23, 1
        %s184 = scalar_select %p183, %s23, 1
        %p185 = scmp.lt.s32.totalorder %s24, 0
        %s186 = scalar_select %p185, %s24, 0
        %s187 = sadd.s32 %s186, %s184
        %s188 = scalar_lea.vmem %s1, %s187
        %p189 = pneg %p82
        %p190 = pneg %p79
        %p191 = pneg %p110
        %p192 = pneg %p107
        %s193 = sand.u32 %s97, 1
        %s194 = scalar_lea.sflag [#allocation4], %s193
        %s195 = sand.u32 %s97, 1
        %s196 = scalar_lea.vmem [#allocation5], %s195
        %p197 = scmp.lt.s32.totalorder %s23, 1
        %s198 = scalar_select %p197, %s23, 1
        %p199 = scmp.lt.s32.totalorder %s24, 0
        %s200 = scalar_select %p199, %s24, 0
        %s201 = sadd.s32 %s200, %s198
        %s202 = scalar_lea.vmem %s1, %s201
        %v203 = vld [vmem:[%s171] sm:$0xff]
        %v204 = vld [vmem:[%s171 + $0x8] sm:$0xff]
        %v205 = vld [vmem:[%s202] sm:$0x1]
        %v206 = vmax.f32 %v203, %v204
        %v207 = vrot.slane %v206, 4
        %v208 = vmax.f32 %v206, %v207
        %v209 = vrot.slane %v208, 2
        %v210 = vmax.f32 %v208, %v209
        %v211 = vrot.slane %v210, 1
        %v212 = vmax.f32 %v210, %v211
        %v213 = vsub.f32 %v203, %v212
        %v214 = vsub.f32 %v204, %v212
        %v215 = vmul.f32 %v213, 1.442695
        %v216 = vpow.pop %v215
        %v217 = vmul.f32 %v214, 1.442695
        %v218 = vpow.pop %v217
        %v219 = vadd.f32 %v216, %v218
        %v220 = vrot.slane %v219, 4
        %v221 = vadd.f32 %v219, %v220
        %v222 = vrot.slane %v221, 2
        %v223 = vadd.f32 %v221, %v222
        %v224 = vrot.slane %v223, 1
        %v225 = vadd.f32 %v223, %v224
        %v226 = vlaneseq
        %v227 = vshrl.u32 %v226, 7
        %v228 = vadd.s32 %v227, 8
        %v229 = vlaneseq
        %v230 = vshrl.u32 %v229, 7
        %v231 = vsub.s32 0, %v230
        %v232 = vrot.slane %v205, %v231
        %vm233 = vcmp.eq.s32.totalorder %v227, %v232
        %vm234 = vcmp.eq.s32.totalorder %v228, %v232
        %v235 = vsel %vm233, %v213, 0.0
        %v236 = vsel %vm234, %v214, 0.0
        %v237 = vadd.f32 %v235, %v236
        %v238 = vrot.slane %v237, 4
        %v239 = vadd.f32 %v237, %v238
        %v240 = vrot.slane %v239, 2
        %v241 = vadd.f32 %v239, %v240
        %v242 = vrot.slane %v241, 1
        %v243 = vadd.f32 %v241, %v242
        %v244 = vlog2.pop %v225
        %v245 = vmul.f32 %v244, 0.6931472
        %v246 = vsub.f32 %v245, %v243
        %s247 = smul.u32 %s24, 128
        %v248 = vlaneseq
        %v249 = vand.u32 %v248, 127
        %v250 = vstv %s247
        %v251 = vadd.s32 %v250, %v249
        %vm252 = vcmp.lt.s32.totalorder %v251, 8
        %v253 = vsel %vm252, %v246, 0.0
        %254 = vadd.xlane.f32.xlu0 %v253
        %v255 = vpop.xlane.xlu0 %254
        %256 = vst [vmem:[%s196] sm:$0x1] %v255
        %s257 = sand.u32 %s97, 1
        %s258 = scalar_lea.sflag [#allocation4], %s257
        %s259 = sand.u32 %s97, 1
        %s260 = scalar_lea.vmem [#allocation5], %s259
        // Predicated region
        $region33: #{tpu_custom_call.1} parent=27 // pred_check
          %p261 = pneg %p107
        $region34: #{tpu_custom_call.1} parent=27 // pred_check_branch
          %263 = sbr.rel (%p261) target = $region36
        $region35: #{tpu_custom_call.1} parent=27 // pred_region
          %s265 = ssub.s32 16, 16
          %266 = vsyncadd %s258, %s265
          %s267 = sadd.s32 %s24, %s23
          %s268 = smul.addr %s267, 16
          %s269 = scalar_lea.hbm %s2, %s268
          %s271 = sshll.u32 %s260, 4
          %s272 = int_to_ptr.vmem [resolvable:$true] %s271
          %274 = dma.vmem_to_hbm [thread:$0]  %s272, 16, %s269, %s258
        $region36: #{tpu_custom_call.1} parent=27 // pred_fallthru
          _
      $region28: #{tpu_custom_call.1} parent=5 // pred_fallthru
        _
      %p275 = scmp.le.s32.totalorder 2, %s14
      // Predicated region
      $region37: #{tpu_custom_call.1} parent=5 // pred_check
        %p276 = pneg %p275
      $region38: #{tpu_custom_call.1} parent=5 // pred_check_branch
        %278 = sbr.rel (%p276) target = $region40
      $region39: #{tpu_custom_call.1} parent=5 // pred_region
        %s279 = ssub.s32 %s14, 2
        // Predicated region
        $region41: #{tpu_custom_call.1} parent=39 // pred_check
          %p280 = pneg %p113
        $region42: #{tpu_custom_call.1} parent=39 // pred_check_branch
          %282 = sbr.rel (%p280) target = $region44
        $region43: #{tpu_custom_call.1} parent=39 // pred_region
          %s283 = sand.u32 %s98, 1
          %s284 = scalar_lea.sflag [#allocation4], %s283
          %s285 = sand.u32 %s98, 1
          %s286 = scalar_lea.vmem [#allocation5], %s285
          %287 = dma.done %s284, 16
        $region44: #{tpu_custom_call.1} parent=39 // pred_fallthru
          _
      $region40: #{tpu_custom_call.1} parent=5 // pred_fallthru
        _
    $region6: #{tpu_custom_call.1} parent=1 // loop_footer
      %s18 = sadd.s32 1, %s14
    $region7: #{tpu_custom_call.1} parent=1 // loop_footer_branch
      %13 = sbr.rel target = $region3
    $region8: #{tpu_custom_call.1} parent=1 // loop_exit
      _
    %288 = vsyncpa [#allocation3], 1
    %s289 = scalar_lea.sflag [#allocation3], 1
    %290 = vsyncpa %s289, 1
    %291 = vsyncpa [#allocation4], 1
    %s292 = scalar_lea.sflag [#allocation4], 1
    %293 = vsyncpa %s292, 1

</llo_original>
